<compile_context>
chip_gen: v7x
topology: tpu7x:2x2x1
jax: 0.10.0
libtpu: 0.0.40
codegen_flags: <defaults>
</compile_context>

<pallas_src>
import jax
import jax.numpy as jnp
from jax.experimental import pallas as pl
from jax.experimental.pallas import tpu as pltpu

IN_DIM = 7
HID = 128
OUT_DIM = 1


def mlp_kernel(x_ref, w1_ref, b1_ref, w2_ref, b2_ref, w3_ref, b3_ref, o_ref):
    # x_ref: (IN_DIM, tb) f32; weights: bf16 in PyTorch (out, in) layout;
    # biases: f32 (out, 1) columns; o_ref: (1, tb) f32 (lane-dense).
    x = x_ref[...].astype(jnp.bfloat16)

    # fc1 + ReLU : (HID, IN_DIM) @ (IN_DIM, tb) -> (HID, tb)
    h = jnp.dot(w1_ref[...], x, preferred_element_type=jnp.float32)
    h = jnp.maximum(h + b1_ref[...], 0.0)

    # fc2 + ReLU : (HID, HID) @ (HID, tb) -> (HID, tb)   (dominant matmul)
    h = jnp.dot(w2_ref[...], h.astype(jnp.bfloat16),
                preferred_element_type=jnp.float32)
    h = jnp.maximum(h + b2_ref[...], 0.0)

    # fc4 : (1, HID) @ (HID, tb) -> (1, tb) lane-dense logits row
    logits = jnp.dot(w3_ref[...], h.astype(jnp.bfloat16),
                     preferred_element_type=jnp.float32) + b3_ref[...]

    # sigmoid via EUP: exp + approximate reciprocal
    o_ref[...] = pl.reciprocal(1.0 + jnp.exp(-logits), approx=True)


def mlp_forward(x, w1, b1, w2, b2, w3, b3, *, tb=512):
    """x: (B, IN_DIM) f32; weights in PyTorch (out, in) layout; biases (out, 1).

    Returns (B, 1) f32, matching the PyTorch module's forward."""
    B = x.shape[0]
    n_tiles = pl.cdiv(B, tb)
    B_pad = n_tiles * tb
    if B_pad != B:
        x = jnp.pad(x, ((0, B_pad - B), (0, 0)))
    x_t = x.T  # (IN_DIM, B_pad): batch on the lane axis

    bf16 = jnp.bfloat16
    out_row = pl.pallas_call(
        mlp_kernel,
        out_shape=jax.ShapeDtypeStruct((1, B_pad), jnp.float32),
        grid_spec=pltpu.PrefetchScalarGridSpec(
            num_scalar_prefetch=0,
            grid=(n_tiles,),
            in_specs=[
                pl.BlockSpec((IN_DIM, tb), lambda i: (0, i)),    # x^T tile
                pl.BlockSpec((HID, IN_DIM), lambda i: (0, 0)),   # W1 (VMEM-resident)
                pl.BlockSpec((HID, 1), lambda i: (0, 0)),        # b1
                pl.BlockSpec((HID, HID), lambda i: (0, 0)),      # W2 (VMEM-resident)
                pl.BlockSpec((HID, 1), lambda i: (0, 0)),        # b2
                pl.BlockSpec((OUT_DIM, HID), lambda i: (0, 0)),  # W3 (VMEM-resident)
                pl.BlockSpec((OUT_DIM, 1), lambda i: (0, 0)),    # b3
            ],
            out_specs=pl.BlockSpec((1, tb), lambda i: (0, i)),   # lane-dense output
        ),
        compiler_params=pltpu.CompilerParams(
            dimension_semantics=("parallel",),
        ),
    )(x_t, w1.astype(bf16), b1, w2.astype(bf16), b2, w3.astype(bf16), b3)

    # (1, B_pad) row -> (B, 1) column, dropping the padding rows.
    return out_row.reshape(B_pad, 1)[:B]


def init_params(key):
    """Deterministic init mimicking nn.Linear's U(-1/sqrt(fan_in), 1/sqrt(fan_in)).

    Weights are stored in PyTorch (out, in) layout; biases as (out, 1) columns."""
    ks = jax.random.split(key, 6)

    def lin(kw, kb, fan_in, fan_out):
        bound = 1.0 / (fan_in ** 0.5)
        w = jax.random.uniform(kw, (fan_out, fan_in), jnp.float32, -bound, bound)
        b = jax.random.uniform(kb, (fan_out, 1), jnp.float32, -bound, bound)
        return w, b

    w1, b1 = lin(ks[0], ks[1], IN_DIM, HID)
    w2, b2 = lin(ks[2], ks[3], HID, HID)
    w3, b3 = lin(ks[4], ks[5], HID, OUT_DIM)
    return w1, b1, w2, b2, w3, b3


def reference_forward(x, w1, b1, w2, b2, w3, b3):
    h = jnp.maximum(x @ w1.T + b1.T, 0.0)
    h = jnp.maximum(h @ w2.T + b2.T, 0.0)
    return jax.nn.sigmoid(h @ w3.T + b3.T)


if __name__ == "__main__":
    key = jax.random.PRNGKey(0)
    kx, kp = jax.random.split(key)

    # Non-multiple of the 512-row tile: exercises wrapper padding and a 2-step grid.
    B = 1000
    x = jax.random.normal(kx, (B, IN_DIM), dtype=jnp.float32)
    params = init_params(kp)

    out = jax.jit(mlp_forward)(x, *params)
    out = jax.block_until_ready(out)

    ref = reference_forward(x, *params)
    assert out.shape == (B, OUT_DIM)
    # bf16 MXU matmuls + approximate reciprocal => loose (but meaningful for a
    # [0,1] sigmoid output) tolerance vs the f32 reference.
    assert jnp.allclose(out, ref, atol=3e-2, rtol=3e-2), "mismatch vs reference"

    print("KERNEL_OK")
</pallas_src>

<mosaic_0001>
module attributes {stable_mosaic.version = 11 : i64} {
  func.func @mlp_kernel(%arg0: i32, %arg1: memref<7x512xf32, #tpu.memory_space<vmem>>, %arg2: memref<128x7xbf16, #tpu.memory_space<vmem>>, %arg3: memref<128x1xf32, #tpu.memory_space<vmem>>, %arg4: memref<128x128xbf16, #tpu.memory_space<vmem>>, %arg5: memref<128x1xf32, #tpu.memory_space<vmem>>, %arg6: memref<1x128xbf16, #tpu.memory_space<vmem>>, %arg7: memref<1x1xf32, #tpu.memory_space<vmem>>, %arg8: memref<1x512xf32, #tpu.memory_space<vmem>>) attributes {dimension_semantics = [#tpu.dimension_semantics<parallel>], iteration_bounds = array<i64: 2>, scalar_prefetch = 0 : i64, scratch_operands = 0 : i64, tpu.core_type = #tpu.core_type<tc>, window_params = [{transform_indices = @transform_0, window_bounds = array<i64: 7, 512>}, {pipeline_mode = #tpu.pipeline_mode<synchronous>, transform_indices = @transform_1, window_bounds = array<i64: 128, 7>}, {pipeline_mode = #tpu.pipeline_mode<synchronous>, transform_indices = @transform_2, window_bounds = array<i64: 128, 1>}, {pipeline_mode = #tpu.pipeline_mode<synchronous>, transform_indices = @transform_3, window_bounds = array<i64: 128, 128>}, {pipeline_mode = #tpu.pipeline_mode<synchronous>, transform_indices = @transform_4, window_bounds = array<i64: 128, 1>}, {pipeline_mode = #tpu.pipeline_mode<synchronous>, transform_indices = @transform_5, window_bounds = array<i64: 1, 128>}, {pipeline_mode = #tpu.pipeline_mode<synchronous>, transform_indices = @transform_6, window_bounds = array<i64: 1, 1>}, {transform_indices = @transform_7, window_bounds = array<i64: 1, 512>}]} {
    %c0 = arith.constant 0 : index
    %c0_0 = arith.constant 0 : index
    %0 = vector.load %arg1[%c0, %c0_0] : memref<7x512xf32, #tpu.memory_space<vmem>>, vector<7x512xf32>
    %1 = arith.truncf %0 : vector<7x512xf32> to vector<7x512xbf16>
    %c0_1 = arith.constant 0 : index
    %c0_2 = arith.constant 0 : index
    %2 = vector.load %arg2[%c0_1, %c0_2] : memref<128x7xbf16, #tpu.memory_space<vmem>>, vector<128x7xbf16>
    %cst = arith.constant dense<0.000000e+00> : vector<128x512xf32>
    %3 = tpu.matmul %2, %1, %cst {dimension_numbers = #tpu.dot_dimension_numbers<[1], [0], [0], [1], [0, 0, 1, 1], [], []>} : vector<128x7xbf16>, vector<7x512xbf16>, vector<128x512xf32> -> vector<128x512xf32>
    %c0_3 = arith.constant 0 : index
    %c0_4 = arith.constant 0 : index
    %4 = vector.load %arg3[%c0_3, %c0_4] : memref<128x1xf32, #tpu.memory_space<vmem>>, vector<128x1xf32>
    %5 = vector.broadcast %4 : vector<128x1xf32> to vector<128x512xf32>
    %6 = arith.addf %3, %5 : vector<128x512xf32>
    %cst_5 = arith.constant 0.000000e+00 : f32
    %7 = vector.broadcast %cst_5 : f32 to vector<128x512xf32>
    %8 = arith.maximumf %6, %7 : vector<128x512xf32>
    %c0_6 = arith.constant 0 : index
    %c0_7 = arith.constant 0 : index
    %9 = vector.load %arg4[%c0_6, %c0_7] : memref<128x128xbf16, #tpu.memory_space<vmem>>, vector<128x128xbf16>
    %10 = arith.truncf %8 : vector<128x512xf32> to vector<128x512xbf16>
    %cst_8 = arith.constant dense<0.000000e+00> : vector<128x512xf32>
    %11 = tpu.matmul %9, %10, %cst_8 {dimension_numbers = #tpu.dot_dimension_numbers<[1], [0], [0], [1], [0, 0, 1, 1], [], []>} : vector<128x128xbf16>, vector<128x512xbf16>, vector<128x512xf32> -> vector<128x512xf32>
    %c0_9 = arith.constant 0 : index
    %c0_10 = arith.constant 0 : index
    %12 = vector.load %arg5[%c0_9, %c0_10] : memref<128x1xf32, #tpu.memory_space<vmem>>, vector<128x1xf32>
    %13 = vector.broadcast %12 : vector<128x1xf32> to vector<128x512xf32>
    %14 = arith.addf %11, %13 : vector<128x512xf32>
    %cst_11 = arith.constant 0.000000e+00 : f32
    %15 = vector.broadcast %cst_11 : f32 to vector<128x512xf32>
    %16 = arith.maximumf %14, %15 : vector<128x512xf32>
    %c0_12 = arith.constant 0 : index
    %c0_13 = arith.constant 0 : index
    %17 = vector.load %arg6[%c0_12, %c0_13] : memref<1x128xbf16, #tpu.memory_space<vmem>>, vector<1x128xbf16>
    %18 = arith.truncf %16 : vector<128x512xf32> to vector<128x512xbf16>
    %cst_14 = arith.constant dense<0.000000e+00> : vector<1x512xf32>
    %19 = tpu.matmul %17, %18, %cst_14 {dimension_numbers = #tpu.dot_dimension_numbers<[1], [0], [0], [1], [0, 0, 1, 1], [], []>} : vector<1x128xbf16>, vector<128x512xbf16>, vector<1x512xf32> -> vector<1x512xf32>
    %c0_15 = arith.constant 0 : index
    %c0_16 = arith.constant 0 : index
    %20 = vector.load %arg7[%c0_15, %c0_16] : memref<1x1xf32, #tpu.memory_space<vmem>>, vector<1x1xf32>
    %21 = vector.broadcast %20 : vector<1x1xf32> to vector<1x512xf32>
    %22 = arith.addf %19, %21 : vector<1x512xf32>
    %cst_17 = arith.constant 0.000000e+00 : f32
    %23 = vector.broadcast %cst_17 : f32 to vector<1x512xf32>
    %24 = arith.subf %23, %22 : vector<1x512xf32>
    %25 = math.exp %24 : vector<1x512xf32>
    %cst_18 = arith.constant 1.000000e+00 : f32
    %26 = vector.broadcast %cst_18 : f32 to vector<1x512xf32>
    %27 = arith.addf %26, %25 : vector<1x512xf32>
    %28 = tpu.reciprocal %27 {approx = true} : vector<1x512xf32> -> vector<1x512xf32>
    %c0_19 = arith.constant 0 : index
    %c0_20 = arith.constant 0 : index
    %29 = vector.load %arg8[%c0_19, %c0_20] : memref<1x512xf32, #tpu.memory_space<vmem>>, vector<1x512xf32>
    tpu.vector_store %arg8[%c0_19, %c0_20], %28 {strides = array<i32>} : memref<1x512xf32, #tpu.memory_space<vmem>>, vector<1x512xf32>,
    return
  }
  func.func @transform_0(%arg0: i32) -> (i32, i32) {
    %c0_i32 = arith.constant 0 : i32
    %c0_i32_0 = arith.constant 0 : i32
    return %c0_i32, %arg0 : i32, i32
  }
  func.func @transform_1(%arg0: i32) -> (i32, i32) {
    %c0_i32 = arith.constant 0 : i32
    %c0_i32_0 = arith.constant 0 : i32
    %c0_i32_1 = arith.constant 0 : i32
    return %c0_i32, %c0_i32_0 : i32, i32
  }
  func.func @transform_2(%arg0: i32) -> (i32, i32) {
    %c0_i32 = arith.constant 0 : i32
    %c0_i32_0 = arith.constant 0 : i32
    %c0_i32_1 = arith.constant 0 : i32
    return %c0_i32, %c0_i32_0 : i32, i32
  }
  func.func @transform_3(%arg0: i32) -> (i32, i32) {
    %c0_i32 = arith.constant 0 : i32
    %c0_i32_0 = arith.constant 0 : i32
    %c0_i32_1 = arith.constant 0 : i32
    return %c0_i32, %c0_i32_0 : i32, i32
  }
  func.func @transform_4(%arg0: i32) -> (i32, i32) {
    %c0_i32 = arith.constant 0 : i32
    %c0_i32_0 = arith.constant 0 : i32
    %c0_i32_1 = arith.constant 0 : i32
    return %c0_i32, %c0_i32_0 : i32, i32
  }
  func.func @transform_5(%arg0: i32) -> (i32, i32) {
    %c0_i32 = arith.constant 0 : i32
    %c0_i32_0 = arith.constant 0 : i32
    %c0_i32_1 = arith.constant 0 : i32
    return %c0_i32, %c0_i32_0 : i32, i32
  }
  func.func @transform_6(%arg0: i32) -> (i32, i32) {
    %c0_i32 = arith.constant 0 : i32
    %c0_i32_0 = arith.constant 0 : i32
    %c0_i32_1 = arith.constant 0 : i32
    return %c0_i32, %c0_i32_0 : i32, i32
  }
  func.func @transform_7(%arg0: i32) -> (i32, i32) {
    %c0_i32 = arith.constant 0 : i32
    %c0_i32_0 = arith.constant 0 : i32
    return %c0_i32, %arg0 : i32, i32
  }
}

</mosaic_0001>

<llo_original>
// kernel: mlp_forward.1
$region0: #{mlp_forward.1}
  #allocation0 [shape = 'u32[]', space=smem, size = 0x4, offset = 0x4, fixed_abs, tag = 'smem constant byte address 0x4 - core index']
  #allocation1 [shape = 'u32[144,128]{1,0:T(1,128)}', space=vmem, size = 0x12000, scoped, tag = 'internal scratch']
  #allocation2 [shape = 'f32[1,1]{1,0:T(1,128)S(1)}', space=vmem, size = 0x200, scoped, tag = 'scoped memory for mlp_forward.1']
  %s0 = inlined_call_operand.vmem [shape: f32[7,1024], index: 0, kind: input, shape index: {}]
  %s1 = inlined_call_operand.vmem [shape: bf16[128,7], index: 1, kind: input, shape index: {}]
  %s2 = inlined_call_operand.vmem [shape: f32[128,1], index: 2, kind: input, shape index: {}]
  %s3 = inlined_call_operand.vmem [shape: bf16[128,128], index: 3, kind: input, shape index: {}]
  %s4 = inlined_call_operand.vmem [shape: f32[128,1], index: 4, kind: input, shape index: {}]
  %s5 = inlined_call_operand.vmem [shape: bf16[1,128], index: 5, kind: input, shape index: {}]
  %s6 = inlined_call_operand.<no memory space> [shape: f32[1,1], index: 6, kind: input, shape index: {}]
  %s7 = inlined_call_operand.vmem [shape: f32[1,1024], index: 7, kind: output, shape index: {}]
  %s8 = sld [smem:[#allocation0]]
  $region61: #{mlp_forward.1} parent=0
    _
  %s10 = ssub.s32 1, %s8
  %s11 = scalar_select 0, %s10, %s8
  %v12 = vstv %s6
  %13 = vst [vmem:[#allocation2] sm:$0x1] %v12
  loop: start=0, step=1, limit=4
  $region2: #{mlp_forward.1} parent=0 // loop_pre_header
    _
  $region3: #{mlp_forward.1} parent=0 // loop_header
    %s15 = sphi 0, %s19
    %p16 = scmp.ge.s32.totalorder %s15, 4
    %s25 = sphi 0, %s27
    %s28 = sphi 0, %s25
    %s29 = sphi 0, %s28
    %s45 = sphi 0, %s29
    %s49 = sphi 0, %s49
    %s51 = sphi 0, %s49
    %s52 = sphi 0, %s51
    %s66 = sphi 0, %s52
    %s70 = sphi 0, %s70
    %s72 = sphi 0, %s70
    %s73 = sphi 0, %s72
    %s87 = sphi 0, %s73
    %s91 = sphi 0, %s91
    %s93 = sphi 0, %s91
    %s94 = sphi 0, %s93
    %s108 = sphi 0, %s94
    %s112 = sphi 0, %s112
    %s114 = sphi 0, %s112
    %s115 = sphi 0, %s114
    %s129 = sphi 0, %s115
    %s133 = sphi 0, %s133
    %s135 = sphi 0, %s133
    %s136 = sphi 0, %s135
    %s150 = sphi 0, %s136
    %s154 = sphi 0, %s154
    %s156 = sphi 0, %s154
    %s157 = sphi 0, %s156
    %s171 = sphi 0, %s157
    %s177 = sphi 0, %s179
    %s180 = sphi 0, %s177
    %s181 = sphi 0, %s180
    %s197 = sphi 0, %s181
  $region4: #{mlp_forward.1} parent=0 // loop_header_branch
    %18 = sbr.rel (%p16) target = $region8
  $region5: #{mlp_forward.1} parent=0 // loop_body
    %s20 = ssub.s32 %s15, 1
    %s21 = ssub.s32 %s15, 2
    %s22 = sadd.s32 %s15, 1
    %s23 = ssub.s32 %s15, %s22
    %p24 = scmp.eq.s32.totalorder %s23, 0
    %s26 = sadd.s32 %s25, 1
    %s27 = scalar_select %p24, %s25, %s26
    %p30 = pneg %p24
    %p31 = scmp.eq.s32.totalorder %s15, 1
    %p32 = por %p30, %p31
    %p33 = scmp.ne.s32.totalorder %s25, %s28
    %p34 = scmp.eq.s32.totalorder %s15, 0
    %p35 = por %p33, %p34
    %p36 = scmp.ne.s32.totalorder %s25, %s28
    %p37 = scmp.eq.s32.totalorder %s20, 1
    %p38 = por %p36, %p37
    %p39 = scmp.ne.s32.totalorder %s28, %s29
    %p40 = scmp.eq.s32.totalorder %s20, 0
    %p41 = por %p39, %p40
    %p42 = scmp.ne.s32.totalorder %s28, %s29
    %p43 = scmp.eq.s32.totalorder %s21, 1
    %p44 = por %p42, %p43
    %p46 = scmp.ne.s32.totalorder %s29, %s45
    %p47 = scmp.eq.s32.totalorder %s21, 0
    %p48 = por %p46, %p47
    %s50 = sadd.s32 %s49, 1
    %p53 = scmp.eq.s32.totalorder %s15, 1
    %p54 = scmp.ne.s32.totalorder %s49, %s51
    %p55 = scmp.eq.s32.totalorder %s15, 0
    %p56 = por %p54, %p55
    %p57 = scmp.ne.s32.totalorder %s49, %s51
    %p58 = scmp.eq.s32.totalorder %s20, 1
    %p59 = por %p57, %p58
    %p60 = scmp.ne.s32.totalorder %s51, %s52
    %p61 = scmp.eq.s32.totalorder %s20, 0
    %p62 = por %p60, %p61
    %p63 = scmp.ne.s32.totalorder %s51, %s52
    %p64 = scmp.eq.s32.totalorder %s21, 1
    %p65 = por %p63, %p64
    %p67 = scmp.ne.s32.totalorder %s52, %s66
    %p68 = scmp.eq.s32.totalorder %s21, 0
    %p69 = por %p67, %p68
    %s71 = sadd.s32 %s70, 1
    %p74 = scmp.eq.s32.totalorder %s15, 1
    %p75 = scmp.ne.s32.totalorder %s70, %s72
    %p76 = scmp.eq.s32.totalorder %s15, 0
    %p77 = por %p75, %p76
    %p78 = scmp.ne.s32.totalorder %s70, %s72
    %p79 = scmp.eq.s32.totalorder %s20, 1
    %p80 = por %p78, %p79
    %p81 = scmp.ne.s32.totalorder %s72, %s73
    %p82 = scmp.eq.s32.totalorder %s20, 0
    %p83 = por %p81, %p82
    %p84 = scmp.ne.s32.totalorder %s72, %s73
    %p85 = scmp.eq.s32.totalorder %s21, 1
    %p86 = por %p84, %p85
    %p88 = scmp.ne.s32.totalorder %s73, %s87
    %p89 = scmp.eq.s32.totalorder %s21, 0
    %p90 = por %p88, %p89
    %s92 = sadd.s32 %s91, 1
    %p95 = scmp.eq.s32.totalorder %s15, 1
    %p96 = scmp.ne.s32.totalorder %s91, %s93
    %p97 = scmp.eq.s32.totalorder %s15, 0
    %p98 = por %p96, %p97
    %p99 = scmp.ne.s32.totalorder %s91, %s93
    %p100 = scmp.eq.s32.totalorder %s20, 1
    %p101 = por %p99, %p100
    %p102 = scmp.ne.s32.totalorder %s93, %s94
    %p103 = scmp.eq.s32.totalorder %s20, 0
    %p104 = por %p102, %p103
    %p105 = scmp.ne.s32.totalorder %s93, %s94
    %p106 = scmp.eq.s32.totalorder %s21, 1
    %p107 = por %p105, %p106
    %p109 = scmp.ne.s32.totalorder %s94, %s108
    %p110 = scmp.eq.s32.totalorder %s21, 0
    %p111 = por %p109, %p110
    %s113 = sadd.s32 %s112, 1
    %p116 = scmp.eq.s32.totalorder %s15, 1
    %p117 = scmp.ne.s32.totalorder %s112, %s114
    %p118 = scmp.eq.s32.totalorder %s15, 0
    %p119 = por %p117, %p118
    %p120 = scmp.ne.s32.totalorder %s112, %s114
    %p121 = scmp.eq.s32.totalorder %s20, 1
    %p122 = por %p120, %p121
    %p123 = scmp.ne.s32.totalorder %s114, %s115
    %p124 = scmp.eq.s32.totalorder %s20, 0
    %p125 = por %p123, %p124
    %p126 = scmp.ne.s32.totalorder %s114, %s115
    %p127 = scmp.eq.s32.totalorder %s21, 1
    %p128 = por %p126, %p127
    %p130 = scmp.ne.s32.totalorder %s115, %s129
    %p131 = scmp.eq.s32.totalorder %s21, 0
    %p132 = por %p130, %p131
    %s134 = sadd.s32 %s133, 1
    %p137 = scmp.eq.s32.totalorder %s15, 1
    %p138 = scmp.ne.s32.totalorder %s133, %s135
    %p139 = scmp.eq.s32.totalorder %s15, 0
    %p140 = por %p138, %p139
    %p141 = scmp.ne.s32.totalorder %s133, %s135
    %p142 = scmp.eq.s32.totalorder %s20, 1
    %p143 = por %p141, %p142
    %p144 = scmp.ne.s32.totalorder %s135, %s136
    %p145 = scmp.eq.s32.totalorder %s20, 0
    %p146 = por %p144, %p145
    %p147 = scmp.ne.s32.totalorder %s135, %s136
    %p148 = scmp.eq.s32.totalorder %s21, 1
    %p149 = por %p147, %p148
    %p151 = scmp.ne.s32.totalorder %s136, %s150
    %p152 = scmp.eq.s32.totalorder %s21, 0
    %p153 = por %p151, %p152
    %s155 = sadd.s32 %s154, 1
    %p158 = scmp.eq.s32.totalorder %s15, 1
    %p159 = scmp.ne.s32.totalorder %s154, %s156
    %p160 = scmp.eq.s32.totalorder %s15, 0
    %p161 = por %p159, %p160
    %p162 = scmp.ne.s32.totalorder %s154, %s156
    %p163 = scmp.eq.s32.totalorder %s20, 1
    %p164 = por %p162, %p163
    %p165 = scmp.ne.s32.totalorder %s156, %s157
    %p166 = scmp.eq.s32.totalorder %s20, 0
    %p167 = por %p165, %p166
    %p168 = scmp.ne.s32.totalorder %s156, %s157
    %p169 = scmp.eq.s32.totalorder %s21, 1
    %p170 = por %p168, %p169
    %p172 = scmp.ne.s32.totalorder %s157, %s171
    %p173 = scmp.eq.s32.totalorder %s21, 0
    %p174 = por %p172, %p173
    %s175 = ssub.s32 %s15, %s22
    %p176 = scmp.eq.s32.totalorder %s175, 0
    %s178 = sadd.s32 %s177, 1
    %s179 = scalar_select %p176, %s177, %s178
    %p182 = pneg %p176
    %p183 = scmp.eq.s32.totalorder %s15, 1
    %p184 = por %p182, %p183
    %p185 = scmp.ne.s32.totalorder %s177, %s180
    %p186 = scmp.eq.s32.totalorder %s15, 0
    %p187 = por %p185, %p186
    %p188 = scmp.ne.s32.totalorder %s177, %s180
    %p189 = scmp.eq.s32.totalorder %s20, 1
    %p190 = por %p188, %p189
    %p191 = scmp.ne.s32.totalorder %s180, %s181
    %p192 = scmp.eq.s32.totalorder %s20, 0
    %p193 = por %p191, %p192
    %p194 = scmp.ne.s32.totalorder %s180, %s181
    %p195 = scmp.eq.s32.totalorder %s21, 1
    %p196 = por %p194, %p195
    %p198 = scmp.ne.s32.totalorder %s181, %s197
    %p199 = scmp.eq.s32.totalorder %s21, 0
    %p200 = por %p198, %p199
    %p201 = scmp.le.s32.totalorder 1, %s15
    %p202 = scmp.lt.s32.totalorder %s15, 3
    %p203 = pnand %p201, %p202
    %p204 = pneg %p203
    // Predicated region
    $region9: #{mlp_forward.1} parent=5 // pred_check
      _
    $region10: #{mlp_forward.1} parent=5 // pred_check_branch
      %206 = sbr.rel (%p203) target = $region12
    $region11: #{mlp_forward.1} parent=5 // pred_region
      %s207 = ssub.s32 %s15, 1
      // Predicated region
      $region13: #{mlp_forward.1} parent=11 // pred_check
        %p208 = pneg %p62
      $region14: #{mlp_forward.1} parent=11 // pred_check_branch
        %210 = sbr.rel (%p208) target = $region16
      $region15: #{mlp_forward.1} parent=11 // pred_region
        _
      $region16: #{mlp_forward.1} parent=11 // pred_fallthru
        _
      // Predicated region
      $region17: #{mlp_forward.1} parent=11 // pred_check
        %p211 = pneg %p83
      $region18: #{mlp_forward.1} parent=11 // pred_check_branch
        %213 = sbr.rel (%p211) target = $region20
      $region19: #{mlp_forward.1} parent=11 // pred_region
        _
      $region20: #{mlp_forward.1} parent=11 // pred_fallthru
        _
      // Predicated region
      $region21: #{mlp_forward.1} parent=11 // pred_check
        %p214 = pneg %p104
      $region22: #{mlp_forward.1} parent=11 // pred_check_branch
        %216 = sbr.rel (%p214) target = $region24
      $region23: #{mlp_forward.1} parent=11 // pred_region
        _
      $region24: #{mlp_forward.1} parent=11 // pred_fallthru
        _
      // Predicated region
      $region25: #{mlp_forward.1} parent=11 // pred_check
        %p217 = pneg %p125
      $region26: #{mlp_forward.1} parent=11 // pred_check_branch
        %219 = sbr.rel (%p217) target = $region28
      $region27: #{mlp_forward.1} parent=11 // pred_region
        _
      $region28: #{mlp_forward.1} parent=11 // pred_fallthru
        _
      // Predicated region
      $region29: #{mlp_forward.1} parent=11 // pred_check
        %p220 = pneg %p146
      $region30: #{mlp_forward.1} parent=11 // pred_check_branch
        %222 = sbr.rel (%p220) target = $region32
      $region31: #{mlp_forward.1} parent=11 // pred_region
        _
      $region32: #{mlp_forward.1} parent=11 // pred_fallthru
        _
      // Predicated region
      $region33: #{mlp_forward.1} parent=11 // pred_check
        %p223 = pneg %p167
      $region34: #{mlp_forward.1} parent=11 // pred_check_branch
        %225 = sbr.rel (%p223) target = $region36
      $region35: #{mlp_forward.1} parent=11 // pred_region
        _
      $region36: #{mlp_forward.1} parent=11 // pred_fallthru
        _
    $region12: #{mlp_forward.1} parent=5 // pred_fallthru
      _
    %p226 = scmp.lt.s32.totalorder %s15, 2
    // Predicated region
    $region37: #{mlp_forward.1} parent=5 // pred_check
      %p227 = pneg %p226
    $region38: #{mlp_forward.1} parent=5 // pred_check_branch
      %229 = sbr.rel (%p227) target = $region40
    $region39: #{mlp_forward.1} parent=5 // pred_region
      // Predicated region
      $region41: #{mlp_forward.1} parent=39 // pred_check
        %p230 = pneg %p35
      $region42: #{mlp_forward.1} parent=39 // pred_check_branch
        %232 = sbr.rel (%p230) target = $region44
      $region43: #{mlp_forward.1} parent=39 // pred_region
        %s233 = smul.u32 4, %s15
        %p234 = scmp.lt.s32.totalorder %s233, 7
        %s235 = scalar_select %p234, %s233, 7
        %s236 = smul.addr %s235, 8
        %s237 = scalar_lea.vmem %s0, %s236
        %s238 = smul.u32 4, %s15
      $region44: #{mlp_forward.1} parent=39 // pred_fallthru
        _
    $region40: #{mlp_forward.1} parent=5 // pred_fallthru
      _
    %p239 = scmp.le.s32.totalorder 1, %s15
    %p240 = scmp.lt.s32.totalorder %s15, 3
    %p241 = pnand %p239, %p240
    %p242 = pneg %p241
    // Predicated region
    $region45: #{mlp_forward.1} parent=5 // pred_check
      _
    $region46: #{mlp_forward.1} parent=5 // pred_check_branch
      %244 = sbr.rel (%p241) target = $region48
    $region47: #{mlp_forward.1} parent=5 // pred_region
      %s245 = ssub.s32 %s15, 1
      %s246 = smul.u32 4, %s20
      %p247 = scmp.lt.s32.totalorder %s246, 7
      %s248 = scalar_select %p247, %s246, 7
      %s249 = smul.addr %s248, 8
      %s250 = scalar_lea.vmem %s0, %s249
      %p251 = pneg %p41
      %p252 = pneg %p38
      %p253 = pneg %p62
      %p254 = pneg %p59
      %p255 = pneg %p83
      %p256 = pneg %p80
      %p257 = pneg %p104
      %p258 = pneg %p101
      %p259 = pneg %p125
      %p260 = pneg %p122
      %p261 = pneg %p146
      %p262 = pneg %p143
      %p263 = pneg %p167
      %p264 = pneg %p164
      %p265 = pneg %p193
      %p266 = pneg %p190
      %s267 = smul.u32 4, %s20
      %p268 = scmp.lt.s32.totalorder %s267, 7
      %s269 = scalar_select %p268, %s267, 7
      %s270 = scalar_lea.vmem %s7, %s269
      %s271 = smul.u32 4, %s20
      %p272 = scmp.lt.s32.totalorder %s271, 7
      %s273 = scalar_select %p272, %s271, 7
      %s274 = smul.addr %s273, 8
      %s275 = scalar_lea.vmem %s0, %s274
      %s276 = smul.u32 4, %s20
      %s277 = smul.u32 4, %s20
      %p278 = scmp.lt.s32.totalorder %s277, 7
      %s279 = scalar_select %p278, %s277, 7
      %s280 = scalar_lea.vmem %s7, %s279
      %s281 = smul.u32 4, %s20
      %v283 = vld [vmem:[%s275] sm:$0x7f]
      %v284 = vld [vmem:[%s275 + $0x8] sm:$0x7f]
      %v285 = vld [vmem:[%s275 + $0x10] sm:$0x7f]
      %v286 = vld [vmem:[%s275 + $0x18] sm:$0x7f]
      %v287 = vpack.c.bf16 %v283, %v283
      %v288 = vpack.c.bf16 %v284, %v284
      %v289 = vpack.c.bf16 %v285, %v285
      %v290 = vpack.c.bf16 %v286, %v286
      %v291 = vld [vmem:[%s1] sm:$0xf]
      %v292 = vld [vmem:[%s1 + $0x4] sm:$0xf]
      %v293 = vld [vmem:[%s1 + $0x8] sm:$0xf]
      %v294 = vld [vmem:[%s1 + $0xc] sm:$0xf]
      %v295 = vld [vmem:[%s1 + $0x10] sm:$0xf]
      %v296 = vld [vmem:[%s1 + $0x14] sm:$0xf]
      %v297 = vld [vmem:[%s1 + $0x18] sm:$0xf]
      %v298 = vld [vmem:[%s1 + $0x1c] sm:$0xf]
      %v299 = vld [vmem:[%s1 + $0x20] sm:$0xf]
      %v300 = vld [vmem:[%s1 + $0x24] sm:$0xf]
      %v301 = vld [vmem:[%s1 + $0x28] sm:$0xf]
      %v302 = vld [vmem:[%s1 + $0x2c] sm:$0xf]
      %v303 = vld [vmem:[%s1 + $0x30] sm:$0xf]
      %v304 = vld [vmem:[%s1 + $0x34] sm:$0xf]
      %v305 = vld [vmem:[%s1 + $0x38] sm:$0xf]
      %v306 = vld [vmem:[%s1 + $0x3c] sm:$0xf]
      %v307 = vld [vmem:[%s2] sm:$0xff]
      %v308 = vld [vmem:[%s2 + $0x8] sm:$0xff]
      %v309 = vld [vmem:[%s2 + $0x10] sm:$0xff]
      %v310 = vld [vmem:[%s2 + $0x18] sm:$0xff]
      %v311 = vld [vmem:[%s2 + $0x20] sm:$0xff]
      %v312 = vld [vmem:[%s2 + $0x28] sm:$0xff]
      %v313 = vld [vmem:[%s2 + $0x30] sm:$0xff]
      %v314 = vld [vmem:[%s2 + $0x38] sm:$0xff]
      %v315 = vld [vmem:[%s2 + $0x40] sm:$0xff]
      %v316 = vld [vmem:[%s2 + $0x48] sm:$0xff]
      %v317 = vld [vmem:[%s2 + $0x50] sm:$0xff]
      %v318 = vld [vmem:[%s2 + $0x58] sm:$0xff]
      %v319 = vld [vmem:[%s2 + $0x60] sm:$0xff]
      %v320 = vld [vmem:[%s2 + $0x68] sm:$0xff]
      %v321 = vld [vmem:[%s2 + $0x70] sm:$0xff]
      %v322 = vld [vmem:[%s2 + $0x78] sm:$0xff]
      %324 = vset.pattern.permute.xlu0 0
      %325 = vperm.xlu0 %324, %v307
      %v326 = vpop.permute.xlu0 %325
      %329 = vset.pattern.permute.xlu0 0
      %330 = vperm.xlu0 %329, %v308
      %v331 = vpop.permute.xlu0 %330
      %334 = vset.pattern.permute.xlu0 0
      %335 = vperm.xlu0 %334, %v309
      %v336 = vpop.permute.xlu0 %335
      %339 = vset.pattern.permute.xlu0 0
      %340 = vperm.xlu0 %339, %v310
      %v341 = vpop.permute.xlu0 %340
      %344 = vset.pattern.permute.xlu0 0
      %345 = vperm.xlu0 %344, %v311
      %v346 = vpop.permute.xlu0 %345
      %349 = vset.pattern.permute.xlu0 0
      %350 = vperm.xlu0 %349, %v312
      %v351 = vpop.permute.xlu0 %350
      %354 = vset.pattern.permute.xlu0 0
      %355 = vperm.xlu0 %354, %v313
      %v356 = vpop.permute.xlu0 %355
      %359 = vset.pattern.permute.xlu0 0
      %360 = vperm.xlu0 %359, %v314
      %v361 = vpop.permute.xlu0 %360
      %364 = vset.pattern.permute.xlu0 0
      %365 = vperm.xlu0 %364, %v315
      %v366 = vpop.permute.xlu0 %365
      %369 = vset.pattern.permute.xlu0 0
      %370 = vperm.xlu0 %369, %v316
      %v371 = vpop.permute.xlu0 %370
      %374 = vset.pattern.permute.xlu0 0
      %375 = vperm.xlu0 %374, %v317
      %v376 = vpop.permute.xlu0 %375
      %379 = vset.pattern.permute.xlu0 0
      %380 = vperm.xlu0 %379, %v318
      %v381 = vpop.permute.xlu0 %380
      %384 = vset.pattern.permute.xlu0 0
      %385 = vperm.xlu0 %384, %v319
      %v386 = vpop.permute.xlu0 %385
      %389 = vset.pattern.permute.xlu0 0
      %390 = vperm.xlu0 %389, %v320
      %v391 = vpop.permute.xlu0 %390
      %394 = vset.pattern.permute.xlu0 0
      %395 = vperm.xlu0 %394, %v321
      %v396 = vpop.permute.xlu0 %395
      %399 = vset.pattern.permute.xlu0 0
      %400 = vperm.xlu0 %399, %v322
      %v401 = vpop.permute.xlu0 %400
      %v419 = vunpack.c.l.b16 %v291
      %v420 = vunpack.c.l.b16 %v292
      %v421 = vunpack.c.l.b16 %v293
      %v422 = vunpack.c.l.b16 %v294
      %v423 = vunpack.c.l.b16 %v295
      %v424 = vunpack.c.l.b16 %v296
      %v425 = vunpack.c.l.b16 %v297
      %v426 = vunpack.c.l.b16 %v298
      %v427 = vunpack.c.l.b16 %v299
      %v428 = vunpack.c.l.b16 %v300
      %v429 = vunpack.c.l.b16 %v301
      %v430 = vunpack.c.l.b16 %v302
      %v431 = vunpack.c.l.b16 %v303
      %v432 = vunpack.c.l.b16 %v304
      %v433 = vunpack.c.l.b16 %v305
      %v434 = vunpack.c.l.b16 %v306
      %v435 = vpack.c.b16 %v420, %v419
      %v436 = vpack.c.b16 %v422, %v421
      %v437 = vpack.c.b16 %v424, %v423
      %v438 = vpack.c.b16 %v426, %v425
      %v439 = vpack.c.b16 %v428, %v427
      %v440 = vpack.c.b16 %v430, %v429
      %v441 = vpack.c.b16 %v432, %v431
      %v442 = vpack.c.b16 %v434, %v433
      %vm443 = vcmask 56320
      %v445 = vsel %vm443, %v435, 0
      %v448 = vsel %vm443, %v436, 0
      %v451 = vsel %vm443, %v437, 0
      %v454 = vsel %vm443, %v438, 0
      %v457 = vsel %vm443, %v439, 0
      %v460 = vsel %vm443, %v440, 0
      %v463 = vsel %vm443, %v441, 0
      %v466 = vsel %vm443, %v442, 0
      %vm468 = vcmask 1042432
      %vm469 = vcmask 1043456
      %v470 = vsel %vm468, 4294967295, 65535
      %v471 = vsel %vm469, %v470, 0
      %v473 = vand.u32 %v287, %v471
      %v476 = vand.u32 %v288, %v471
      %v479 = vand.u32 %v289, %v471
      %v482 = vand.u32 %v290, %v471
      %484 = vmatprep.subr.bf16.mxu0 %v476
      %485 = vmatpush1.bf16.msra.mxu0 %v473
      %486 = vmatprep.subr.bf16.mxu0 0
      %487 = vmatpush1.bf16.msra.mxu0 0
      %488 = vmatprep.subr.bf16.mxu0 0
      %489 = vmatpush1.bf16.msra.mxu0 0
      %490 = vmatprep.subr.bf16.mxu0 0
      %491 = vmatpush1.bf16.msra.mxu0 0
      %492 = vmatprep.subr.bf16.mxu0 0
      %493 = vmatpush1.bf16.msra.mxu0 0
      %494 = vmatprep.subr.bf16.mxu0 0
      %495 = vmatpush1.bf16.msra.mxu0 0
      %496 = vmatprep.subr.bf16.mxu0 0
      %497 = vmatpush1.bf16.msra.mxu0 0
      %498 = vmatprep.subr.bf16.mxu0 0
      %499 = vmatpush1.bf16.msra.mxu0 0
      %500 = vmatprep.subr.bf16.mxu0 0
      %501 = vmatpush1.bf16.msra.mxu0 0
      %502 = vmatprep.subr.bf16.mxu0 0
      %503 = vmatpush1.bf16.msra.mxu0 0
      %504 = vmatprep.subr.bf16.mxu0 0
      %505 = vmatpush1.bf16.msra.mxu0 0
      %506 = vmatprep.subr.bf16.mxu0 0
      %507 = vmatpush1.bf16.msra.mxu0 0
      %508 = vmatprep.subr.bf16.mxu0 0
      %509 = vmatpush1.bf16.msra.mxu0 0
      %510 = vmatprep.subr.bf16.mxu0 0
      %511 = vmatpush1.bf16.msra.mxu0 0
      %512 = vmatprep.subr.bf16.mxu0 0
      %513 = vmatpush1.bf16.msra.mxu0 0
      %514 = vmatprep.subr.bf16.mxu0 0
      %515 = vmatpush1.bf16.msra.mxu0 0
      %516 = vmatprep.mubr.bf16.mxu0 0
      %517 = vmatmul.mubr.bf16.gmra.mrb[0].mxu0 %v445
      %v518 = vpop.f32.mrb[0].mxu0
      %v519 = vadd.f32 %v326, %v518
      %v520 = vpop.f32.mrb[0].mxu0
      %v521 = vadd.f32 %v326, %v520
      %v522 = vpop.f32.mrb[0].mxu0
      %v523 = vadd.f32 %v331, %v522
      %v524 = vpop.f32.mrb[0].mxu0
      %v525 = vadd.f32 %v331, %v524
      %526 = vmatprep.mubr.bf16.mxu0 0
      %527 = vmatmul.mubr.bf16.gmra.mrb[0].mxu0 %v448
      %v528 = vpop.f32.mrb[0].mxu0
      %v529 = vadd.f32 %v336, %v528
      %v530 = vpop.f32.mrb[0].mxu0
      %v531 = vadd.f32 %v336, %v530
      %v532 = vpop.f32.mrb[0].mxu0
      %v533 = vadd.f32 %v341, %v532
      %v534 = vpop.f32.mrb[0].mxu0
      %v535 = vadd.f32 %v341, %v534
      %536 = vmatprep.mubr.bf16.mxu0 0
      %537 = vmatmul.mubr.bf16.gmra.mrb[0].mxu0 %v451
      %v538 = vpop.f32.mrb[0].mxu0
      %v539 = vadd.f32 %v346, %v538
      %v540 = vpop.f32.mrb[0].mxu0
      %v541 = vadd.f32 %v346, %v540
      %v542 = vpop.f32.mrb[0].mxu0
      %v543 = vadd.f32 %v351, %v542
      %v544 = vpop.f32.mrb[0].mxu0
      %v545 = vadd.f32 %v351, %v544
      %546 = vmatprep.mubr.bf16.mxu0 0
      %547 = vmatmul.mubr.bf16.gmra.mrb[0].mxu0 %v454
      %v548 = vpop.f32.mrb[0].mxu0
      %v549 = vadd.f32 %v356, %v548
      %v550 = vpop.f32.mrb[0].mxu0
      %v551 = vadd.f32 %v356, %v550
      %v552 = vpop.f32.mrb[0].mxu0
      %v553 = vadd.f32 %v361, %v552
      %v554 = vpop.f32.mrb[0].mxu0
      %v555 = vadd.f32 %v361, %v554
      %556 = vmatprep.mubr.bf16.mxu0 0
      %557 = vmatmul.mubr.bf16.gmra.mrb[0].mxu0 %v457
      %v558 = vpop.f32.mrb[0].mxu0
      %v559 = vadd.f32 %v366, %v558
      %v560 = vpop.f32.mrb[0].mxu0
      %v561 = vadd.f32 %v366, %v560
      %v562 = vpop.f32.mrb[0].mxu0
      %v563 = vadd.f32 %v371, %v562
      %v564 = vpop.f32.mrb[0].mxu0
      %v565 = vadd.f32 %v371, %v564
      %566 = vmatprep.mubr.bf16.mxu0 0
      %567 = vmatmul.mubr.bf16.gmra.mrb[0].mxu0 %v460
      %v568 = vpop.f32.mrb[0].mxu0
      %v569 = vadd.f32 %v376, %v568
      %v570 = vpop.f32.mrb[0].mxu0
      %v571 = vadd.f32 %v376, %v570
      %v572 = vpop.f32.mrb[0].mxu0
      %v573 = vadd.f32 %v381, %v572
      %v574 = vpop.f32.mrb[0].mxu0
      %v575 = vadd.f32 %v381, %v574
      %576 = vmatprep.mubr.bf16.mxu0 0
      %577 = vmatmul.mubr.bf16.gmra.mrb[0].mxu0 %v463
      %v578 = vpop.f32.mrb[0].mxu0
      %v579 = vadd.f32 %v386, %v578
      %v580 = vpop.f32.mrb[0].mxu0
      %v581 = vadd.f32 %v386, %v580
      %v582 = vpop.f32.mrb[0].mxu0
      %v583 = vadd.f32 %v391, %v582
      %v584 = vpop.f32.mrb[0].mxu0
      %v585 = vadd.f32 %v391, %v584
      %586 = vmatprep.mubr.bf16.mxu0 0
      %587 = vmatmul.mubr.bf16.gmra.mrb[0].mxu0 %v466
      %v588 = vpop.f32.mrb[0].mxu0
      %v589 = vadd.f32 %v396, %v588
      %v590 = vpop.f32.mrb[0].mxu0
      %v591 = vadd.f32 %v396, %v590
      %v592 = vpop.f32.mrb[0].mxu0
      %v593 = vadd.f32 %v401, %v592
      %v594 = vpop.f32.mrb[0].mxu0
      %v595 = vadd.f32 %v401, %v594
      %596 = vdwg.mxu0
      %597 = vmatprep.subr.bf16.mxu0 %v482
      %598 = vmatpush1.bf16.msra.mxu0 %v479
      %599 = vmatprep.subr.bf16.mxu0 0
      %600 = vmatpush1.bf16.msra.mxu0 0
      %601 = vmatprep.subr.bf16.mxu0 0
      %602 = vmatpush1.bf16.msra.mxu0 0
      %603 = vmatprep.subr.bf16.mxu0 0
      %604 = vmatpush1.bf16.msra.mxu0 0
      %605 = vmatprep.subr.bf16.mxu0 0
      %606 = vmatpush1.bf16.msra.mxu0 0
      %607 = vmatprep.subr.bf16.mxu0 0
      %608 = vmatpush1.bf16.msra.mxu0 0
      %609 = vmatprep.subr.bf16.mxu0 0
      %610 = vmatpush1.bf16.msra.mxu0 0
      %611 = vmatprep.subr.bf16.mxu0 0
      %612 = vmatpush1.bf16.msra.mxu0 0
      %613 = vmatprep.subr.bf16.mxu0 0
      %614 = vmatpush1.bf16.msra.mxu0 0
      %615 = vmatprep.subr.bf16.mxu0 0
      %616 = vmatpush1.bf16.msra.mxu0 0
      %617 = vmatprep.subr.bf16.mxu0 0
      %618 = vmatpush1.bf16.msra.mxu0 0
      %619 = vmatprep.subr.bf16.mxu0 0
      %620 = vmatpush1.bf16.msra.mxu0 0
      %621 = vmatprep.subr.bf16.mxu0 0
      %622 = vmatpush1.bf16.msra.mxu0 0
      %623 = vmatprep.subr.bf16.mxu0 0
      %624 = vmatpush1.bf16.msra.mxu0 0
      %625 = vmatprep.subr.bf16.mxu0 0
      %626 = vmatpush1.bf16.msra.mxu0 0
      %627 = vmatprep.subr.bf16.mxu0 0
      %628 = vmatpush1.bf16.msra.mxu0 0
      %629 = vmatprep.mubr.bf16.mxu0 0
      %630 = vmatmul.mubr.bf16.gmra.mrb[0].mxu0 %v445
      %v631 = vpop.f32.mrb[0].mxu0
      %v632 = vadd.f32 %v326, %v631
      %v633 = vpop.f32.mrb[0].mxu0
      %v634 = vadd.f32 %v326, %v633
      %v635 = vpop.f32.mrb[0].mxu0
      %v636 = vadd.f32 %v331, %v635
      %v637 = vpop.f32.mrb[0].mxu0
      %v638 = vadd.f32 %v331, %v637
      %639 = vmatprep.mubr.bf16.mxu0 0
      %640 = vmatmul.mubr.bf16.gmra.mrb[0].mxu0 %v448
      %v641 = vpop.f32.mrb[0].mxu0
      %v642 = vadd.f32 %v336, %v641
      %v643 = vpop.f32.mrb[0].mxu0
      %v644 = vadd.f32 %v336, %v643
      %v645 = vpop.f32.mrb[0].mxu0
      %v646 = vadd.f32 %v341, %v645
      %v647 = vpop.f32.mrb[0].mxu0
      %v648 = vadd.f32 %v341, %v647
      %649 = vmatprep.mubr.bf16.mxu0 0
      %650 = vmatmul.mubr.bf16.gmra.mrb[0].mxu0 %v451
      %v651 = vpop.f32.mrb[0].mxu0
      %v652 = vadd.f32 %v346, %v651
      %v653 = vpop.f32.mrb[0].mxu0
      %v654 = vadd.f32 %v346, %v653
      %v655 = vpop.f32.mrb[0].mxu0
      %v656 = vadd.f32 %v351, %v655
      %v657 = vpop.f32.mrb[0].mxu0
      %v658 = vadd.f32 %v351, %v657
      %659 = vmatprep.mubr.bf16.mxu0 0
      %660 = vmatmul.mubr.bf16.gmra.mrb[0].mxu0 %v454
      %v661 = vpop.f32.mrb[0].mxu0
      %v662 = vadd.f32 %v356, %v661
      %v663 = vpop.f32.mrb[0].mxu0
      %v664 = vadd.f32 %v356, %v663
      %v665 = vpop.f32.mrb[0].mxu0
      %v666 = vadd.f32 %v361, %v665
      %v667 = vpop.f32.mrb[0].mxu0
      %v668 = vadd.f32 %v361, %v667
      %669 = vmatprep.mubr.bf16.mxu0 0
      %670 = vmatmul.mubr.bf16.gmra.mrb[0].mxu0 %v457
      %v671 = vpop.f32.mrb[0].mxu0
      %v672 = vadd.f32 %v366, %v671
      %v673 = vpop.f32.mrb[0].mxu0
      %v674 = vadd.f32 %v366, %v673
      %v675 = vpop.f32.mrb[0].mxu0
      %v676 = vadd.f32 %v371, %v675
      %v677 = vpop.f32.mrb[0].mxu0
      %v678 = vadd.f32 %v371, %v677
      %679 = vmatprep.mubr.bf16.mxu0 0
      %680 = vmatmul.mubr.bf16.gmra.mrb[0].mxu0 %v460
      %v681 = vpop.f32.mrb[0].mxu0
      %v682 = vadd.f32 %v376, %v681
      %v683 = vpop.f32.mrb[0].mxu0
      %v684 = vadd.f32 %v376, %v683
      %v685 = vpop.f32.mrb[0].mxu0
      %v686 = vadd.f32 %v381, %v685
      %v687 = vpop.f32.mrb[0].mxu0
      %v688 = vadd.f32 %v381, %v687
      %689 = vmatprep.mubr.bf16.mxu0 0
      %690 = vmatmul.mubr.bf16.gmra.mrb[0].mxu0 %v463
      %v691 = vpop.f32.mrb[0].mxu0
      %v692 = vadd.f32 %v386, %v691
      %v693 = vpop.f32.mrb[0].mxu0
      %v694 = vadd.f32 %v386, %v693
      %v695 = vpop.f32.mrb[0].mxu0
      %v696 = vadd.f32 %v391, %v695
      %v697 = vpop.f32.mrb[0].mxu0
      %v698 = vadd.f32 %v391, %v697
      %699 = vmatprep.mubr.bf16.mxu0 0
      %700 = vmatmul.mubr.bf16.gmra.mrb[0].mxu0 %v466
      %v701 = vpop.f32.mrb[0].mxu0
      %v702 = vadd.f32 %v396, %v701
      %v703 = vpop.f32.mrb[0].mxu0
      %v704 = vadd.f32 %v396, %v703
      %v705 = vpop.f32.mrb[0].mxu0
      %v706 = vadd.f32 %v401, %v705
      %v707 = vpop.f32.mrb[0].mxu0
      %v708 = vadd.f32 %v401, %v707
      %709 = vdwg.mxu0
      %v710 = vmax.f32 %v519, 0.0
      %v711 = vmax.f32 %v521, 0.0
      %v712 = vmax.f32 %v632, 0.0
      %v713 = vmax.f32 %v634, 0.0
      %v714 = vmax.f32 %v523, 0.0
      %v715 = vmax.f32 %v525, 0.0
      %v716 = vmax.f32 %v636, 0.0
      %v717 = vmax.f32 %v638, 0.0
      %v718 = vmax.f32 %v529, 0.0
      %v719 = vmax.f32 %v531, 0.0
      %v720 = vmax.f32 %v642, 0.0
      %v721 = vmax.f32 %v644, 0.0
      %v722 = vmax.f32 %v533, 0.0
      %v723 = vmax.f32 %v535, 0.0
      %v724 = vmax.f32 %v646, 0.0
      %v725 = vmax.f32 %v648, 0.0
      %v726 = vmax.f32 %v539, 0.0
      %v727 = vmax.f32 %v541, 0.0
      %v728 = vmax.f32 %v652, 0.0
      %v729 = vmax.f32 %v654, 0.0
      %v730 = vmax.f32 %v543, 0.0
      %v731 = vmax.f32 %v545, 0.0
      %v732 = vmax.f32 %v656, 0.0
      %v733 = vmax.f32 %v658, 0.0
      %v734 = vmax.f32 %v549, 0.0
      %v735 = vmax.f32 %v551, 0.0
      %v736 = vmax.f32 %v662, 0.0
      %v737 = vmax.f32 %v664, 0.0
      %v738 = vmax.f32 %v553, 0.0
      %v739 = vmax.f32 %v555, 0.0
      %v740 = vmax.f32 %v666, 0.0
      %v741 = vmax.f32 %v668, 0.0
      %v742 = vmax.f32 %v559, 0.0
      %v743 = vmax.f32 %v561, 0.0
      %v744 = vmax.f32 %v672, 0.0
      %v745 = vmax.f32 %v674, 0.0
      %v746 = vmax.f32 %v563, 0.0
      %v747 = vmax.f32 %v565, 0.0
      %v748 = vmax.f32 %v676, 0.0
      %v749 = vmax.f32 %v678, 0.0
      %v750 = vmax.f32 %v569, 0.0
      %v751 = vmax.f32 %v571, 0.0
      %v752 = vmax.f32 %v682, 0.0
      %v753 = vmax.f32 %v684, 0.0
      %v754 = vmax.f32 %v573, 0.0
      %v755 = vmax.f32 %v575, 0.0
      %v756 = vmax.f32 %v686, 0.0
      %v757 = vmax.f32 %v688, 0.0
      %v758 = vmax.f32 %v579, 0.0
      %v759 = vmax.f32 %v581, 0.0
      %v760 = vmax.f32 %v692, 0.0
      %v761 = vmax.f32 %v694, 0.0
      %v762 = vmax.f32 %v583, 0.0
      %v763 = vmax.f32 %v585, 0.0
      %v764 = vmax.f32 %v696, 0.0
      %v765 = vmax.f32 %v698, 0.0
      %v766 = vmax.f32 %v589, 0.0
      %v767 = vmax.f32 %v591, 0.0
      %v768 = vmax.f32 %v702, 0.0
      %v769 = vmax.f32 %v704, 0.0
      %v770 = vmax.f32 %v593, 0.0
      %v771 = vmax.f32 %v595, 0.0
      %v772 = vmax.f32 %v706, 0.0
      %v773 = vmax.f32 %v708, 0.0
      %v774 = vld [vmem:[%s3] sm:$0xf]
      %v775 = vld [vmem:[%s3 + $0x4] sm:$0xf]
      %v776 = vld [vmem:[%s3 + $0x8] sm:$0xf]
      %v777 = vld [vmem:[%s3 + $0xc] sm:$0xf]
      %v778 = vld [vmem:[%s3 + $0x10] sm:$0xf]
      %v779 = vld [vmem:[%s3 + $0x14] sm:$0xf]
      %v780 = vld [vmem:[%s3 + $0x18] sm:$0xf]
      %v781 = vld [vmem:[%s3 + $0x1c] sm:$0xf]
      %v782 = vld [vmem:[%s3 + $0x20] sm:$0xf]
      %v783 = vld [vmem:[%s3 + $0x24] sm:$0xf]
      %v784 = vld [vmem:[%s3 + $0x28] sm:$0xf]
      %v785 = vld [vmem:[%s3 + $0x2c] sm:$0xf]
      %v786 = vld [vmem:[%s3 + $0x30] sm:$0xf]
      %v787 = vld [vmem:[%s3 + $0x34] sm:$0xf]
      %v788 = vld [vmem:[%s3 + $0x38] sm:$0xf]
      %v789 = vld [vmem:[%s3 + $0x3c] sm:$0xf]
      %v790 = vpack.c.bf16 %v714, %v710
      %v791 = vpack.c.bf16 %v715, %v711
      %v792 = vpack.c.bf16 %v716, %v712
      %v793 = vpack.c.bf16 %v717, %v713
      %v794 = vpack.c.bf16 %v722, %v718
      %v795 = vpack.c.bf16 %v723, %v719
      %v796 = vpack.c.bf16 %v724, %v720
      %v797 = vpack.c.bf16 %v725, %v721
      %v798 = vpack.c.bf16 %v730, %v726
      %v799 = vpack.c.bf16 %v731, %v727
      %v800 = vpack.c.bf16 %v732, %v728
      %v801 = vpack.c.bf16 %v733, %v729
      %v802 = vpack.c.bf16 %v738, %v734
      %v803 = vpack.c.bf16 %v739, %v735
      %v804 = vpack.c.bf16 %v740, %v736
      %v805 = vpack.c.bf16 %v741, %v737
      %v806 = vpack.c.bf16 %v746, %v742
      %v807 = vpack.c.bf16 %v747, %v743
      %v808 = vpack.c.bf16 %v748, %v744
      %v809 = vpack.c.bf16 %v749, %v745
      %v810 = vpack.c.bf16 %v754, %v750
      %v811 = vpack.c.bf16 %v755, %v751
      %v812 = vpack.c.bf16 %v756, %v752
      %v813 = vpack.c.bf16 %v757, %v753
      %v814 = vpack.c.bf16 %v762, %v758
      %v815 = vpack.c.bf16 %v763, %v759
      %v816 = vpack.c.bf16 %v764, %v760
      %v817 = vpack.c.bf16 %v765, %v761
      %v818 = vpack.c.bf16 %v770, %v766
      %v819 = vpack.c.bf16 %v771, %v767
      %v820 = vpack.c.bf16 %v772, %v768
      %v821 = vpack.c.bf16 %v773, %v769
      %v822 = vld [vmem:[%s4] sm:$0xff]
      %v823 = vld [vmem:[%s4 + $0x8] sm:$0xff]
      %v824 = vld [vmem:[%s4 + $0x10] sm:$0xff]
      %v825 = vld [vmem:[%s4 + $0x18] sm:$0xff]
      %v826 = vld [vmem:[%s4 + $0x20] sm:$0xff]
      %v827 = vld [vmem:[%s4 + $0x28] sm:$0xff]
      %v828 = vld [vmem:[%s4 + $0x30] sm:$0xff]
      %v829 = vld [vmem:[%s4 + $0x38] sm:$0xff]
      %v830 = vld [vmem:[%s4 + $0x40] sm:$0xff]
      %v831 = vld [vmem:[%s4 + $0x48] sm:$0xff]
      %v832 = vld [vmem:[%s4 + $0x50] sm:$0xff]
      %v833 = vld [vmem:[%s4 + $0x58] sm:$0xff]
      %v834 = vld [vmem:[%s4 + $0x60] sm:$0xff]
      %v835 = vld [vmem:[%s4 + $0x68] sm:$0xff]
      %v836 = vld [vmem:[%s4 + $0x70] sm:$0xff]
      %v837 = vld [vmem:[%s4 + $0x78] sm:$0xff]
      %839 = vset.pattern.permute.xlu0 0
      %840 = vperm.xlu0 %839, %v822
      %v841 = vpop.permute.xlu0 %840
      %844 = vset.pattern.permute.xlu0 0
      %845 = vperm.xlu0 %844, %v823
      %v846 = vpop.permute.xlu0 %845
      %849 = vset.pattern.permute.xlu0 0
      %850 = vperm.xlu0 %849, %v824
      %v851 = vpop.permute.xlu0 %850
      %854 = vset.pattern.permute.xlu0 0
      %855 = vperm.xlu0 %854, %v825
      %v856 = vpop.permute.xlu0 %855
      %859 = vset.pattern.permute.xlu0 0
      %860 = vperm.xlu0 %859, %v826
      %v861 = vpop.permute.xlu0 %860
      %864 = vset.pattern.permute.xlu0 0
      %865 = vperm.xlu0 %864, %v827
      %v866 = vpop.permute.xlu0 %865
      %869 = vset.pattern.permute.xlu0 0
      %870 = vperm.xlu0 %869, %v828
      %v871 = vpop.permute.xlu0 %870
      %874 = vset.pattern.permute.xlu0 0
      %875 = vperm.xlu0 %874, %v829
      %v876 = vpop.permute.xlu0 %875
      %879 = vset.pattern.permute.xlu0 0
      %880 = vperm.xlu0 %879, %v830
      %v881 = vpop.permute.xlu0 %880
      %884 = vset.pattern.permute.xlu0 0
      %885 = vperm.xlu0 %884, %v831
      %v886 = vpop.permute.xlu0 %885
      %889 = vset.pattern.permute.xlu0 0
      %890 = vperm.xlu0 %889, %v832
      %v891 = vpop.permute.xlu0 %890
      %894 = vset.pattern.permute.xlu0 0
      %895 = vperm.xlu0 %894, %v833
      %v896 = vpop.permute.xlu0 %895
      %899 = vset.pattern.permute.xlu0 0
      %900 = vperm.xlu0 %899, %v834
      %v901 = vpop.permute.xlu0 %900
      %904 = vset.pattern.permute.xlu0 0
      %905 = vperm.xlu0 %904, %v835
      %v906 = vpop.permute.xlu0 %905
      %909 = vset.pattern.permute.xlu0 0
      %910 = vperm.xlu0 %909, %v836
      %v911 = vpop.permute.xlu0 %910
      %914 = vset.pattern.permute.xlu0 0
      %915 = vperm.xlu0 %914, %v837
      %v916 = vpop.permute.xlu0 %915
      %v934 = vunpack.c.l.b16 %v774
      %v935 = vunpack.c.l.b16 %v775
      %v936 = vunpack.c.l.b16 %v776
      %v937 = vunpack.c.l.b16 %v777
      %v938 = vunpack.c.l.b16 %v778
      %v939 = vunpack.c.l.b16 %v779
      %v940 = vunpack.c.l.b16 %v780
      %v941 = vunpack.c.l.b16 %v781
      %v942 = vunpack.c.l.b16 %v782
      %v943 = vunpack.c.l.b16 %v783
      %v944 = vunpack.c.l.b16 %v784
      %v945 = vunpack.c.l.b16 %v785
      %v946 = vunpack.c.l.b16 %v786
      %v947 = vunpack.c.l.b16 %v787
      %v948 = vunpack.c.l.b16 %v788
      %v949 = vunpack.c.l.b16 %v789
      %v950 = vpack.c.b16 %v935, %v934
      %v951 = vpack.c.b16 %v937, %v936
      %v952 = vpack.c.b16 %v939, %v938
      %v953 = vpack.c.b16 %v941, %v940
      %v954 = vpack.c.b16 %v943, %v942
      %v955 = vpack.c.b16 %v945, %v944
      %v956 = vpack.c.b16 %v947, %v946
      %v957 = vpack.c.b16 %v949, %v948
      %966 = vmatprep.subr.bf16.mxu0 %v791
      %967 = vmatpush1.bf16.msra.mxu0 %v790
      %968 = vmatprep.subr.bf16.mxu0 %v795
      %969 = vmatpush1.bf16.msra.mxu0 %v794
      %970 = vmatprep.subr.bf16.mxu0 %v799
      %971 = vmatpush1.bf16.msra.mxu0 %v798
      %972 = vmatprep.subr.bf16.mxu0 %v803
      %973 = vmatpush1.bf16.msra.mxu0 %v802
      %974 = vmatprep.subr.bf16.mxu0 %v807
      %975 = vmatpush1.bf16.msra.mxu0 %v806
      %976 = vmatprep.subr.bf16.mxu0 %v811
      %977 = vmatpush1.bf16.msra.mxu0 %v810
      %978 = vmatprep.subr.bf16.mxu0 %v815
      %979 = vmatpush1.bf16.msra.mxu0 %v814
      %980 = vmatprep.subr.bf16.mxu0 %v819
      %981 = vmatpush1.bf16.msra.mxu0 %v818
      %982 = vmatprep.subr.bf16.mxu0 0
      %983 = vmatpush1.bf16.msra.mxu0 0
      %984 = vmatprep.subr.bf16.mxu0 0
      %985 = vmatpush1.bf16.msra.mxu0 0
      %986 = vmatprep.subr.bf16.mxu0 0
      %987 = vmatpush1.bf16.msra.mxu0 0
      %988 = vmatprep.subr.bf16.mxu0 0
      %989 = vmatpush1.bf16.msra.mxu0 0
      %990 = vmatprep.subr.bf16.mxu0 0
      %991 = vmatpush1.bf16.msra.mxu0 0
      %992 = vmatprep.subr.bf16.mxu0 0
      %993 = vmatpush1.bf16.msra.mxu0 0
      %994 = vmatprep.subr.bf16.mxu0 0
      %995 = vmatpush1.bf16.msra.mxu0 0
      %996 = vmatprep.subr.bf16.mxu0 0
      %997 = vmatpush1.bf16.msra.mxu0 0
      %998 = vmatprep.mubr.bf16.mxu0 0
      %999 = vmatmul.mubr.bf16.gmra.mrb[0].mxu0 %v950
      %v1000 = vpop.f32.mrb[0].mxu0
      %v1001 = vadd.f32 %v841, %v1000
      %v1002 = vpop.f32.mrb[0].mxu0
      %v1003 = vadd.f32 %v841, %v1002
      %v1004 = vpop.f32.mrb[0].mxu0
      %v1005 = vadd.f32 %v846, %v1004
      %v1006 = vpop.f32.mrb[0].mxu0
      %v1007 = vadd.f32 %v846, %v1006
      %1008 = vmatprep.mubr.bf16.mxu0 0
      %1009 = vmatmul.mubr.bf16.gmra.mrb[0].mxu0 %v951
      %v1010 = vpop.f32.mrb[0].mxu0
      %v1011 = vadd.f32 %v851, %v1010
      %v1012 = vpop.f32.mrb[0].mxu0
      %v1013 = vadd.f32 %v851, %v1012
      %v1014 = vpop.f32.mrb[0].mxu0
      %v1015 = vadd.f32 %v856, %v1014
      %v1016 = vpop.f32.mrb[0].mxu0
      %v1017 = vadd.f32 %v856, %v1016
      %1018 = vmatprep.mubr.bf16.mxu0 0
      %1019 = vmatmul.mubr.bf16.gmra.mrb[0].mxu0 %v952
      %v1020 = vpop.f32.mrb[0].mxu0
      %v1021 = vadd.f32 %v861, %v1020
      %v1022 = vpop.f32.mrb[0].mxu0
      %v1023 = vadd.f32 %v861, %v1022
      %v1024 = vpop.f32.mrb[0].mxu0
      %v1025 = vadd.f32 %v866, %v1024
      %v1026 = vpop.f32.mrb[0].mxu0
      %v1027 = vadd.f32 %v866, %v1026
      %1028 = vmatprep.mubr.bf16.mxu0 0
      %1029 = vmatmul.mubr.bf16.gmra.mrb[0].mxu0 %v953
      %v1030 = vpop.f32.mrb[0].mxu0
      %v1031 = vadd.f32 %v871, %v1030
      %v1032 = vpop.f32.mrb[0].mxu0
      %v1033 = vadd.f32 %v871, %v1032
      %v1034 = vpop.f32.mrb[0].mxu0
      %v1035 = vadd.f32 %v876, %v1034
      %v1036 = vpop.f32.mrb[0].mxu0
      %v1037 = vadd.f32 %v876, %v1036
      %1038 = vmatprep.mubr.bf16.mxu0 0
      %1039 = vmatmul.mubr.bf16.gmra.mrb[0].mxu0 %v954
      %v1040 = vpop.f32.mrb[0].mxu0
      %v1041 = vadd.f32 %v881, %v1040
      %v1042 = vpop.f32.mrb[0].mxu0
      %v1043 = vadd.f32 %v881, %v1042
      %v1044 = vpop.f32.mrb[0].mxu0
      %v1045 = vadd.f32 %v886, %v1044
      %v1046 = vpop.f32.mrb[0].mxu0
      %v1047 = vadd.f32 %v886, %v1046
      %1048 = vmatprep.mubr.bf16.mxu0 0
      %1049 = vmatmul.mubr.bf16.gmra.mrb[0].mxu0 %v955
      %v1050 = vpop.f32.mrb[0].mxu0
      %v1051 = vadd.f32 %v891, %v1050
      %v1052 = vpop.f32.mrb[0].mxu0
      %v1053 = vadd.f32 %v891, %v1052
      %v1054 = vpop.f32.mrb[0].mxu0
      %v1055 = vadd.f32 %v896, %v1054
      %v1056 = vpop.f32.mrb[0].mxu0
      %v1057 = vadd.f32 %v896, %v1056
      %1058 = vmatprep.mubr.bf16.mxu0 0
      %1059 = vmatmul.mubr.bf16.gmra.mrb[0].mxu0 %v956
      %v1060 = vpop.f32.mrb[0].mxu0
      %v1061 = vadd.f32 %v901, %v1060
      %v1062 = vpop.f32.mrb[0].mxu0
      %v1063 = vadd.f32 %v901, %v1062
      %v1064 = vpop.f32.mrb[0].mxu0
      %v1065 = vadd.f32 %v906, %v1064
      %v1066 = vpop.f32.mrb[0].mxu0
      %v1067 = vadd.f32 %v906, %v1066
      %1068 = vmatprep.mubr.bf16.mxu0 0
      %1069 = vmatmul.mubr.bf16.gmra.mrb[0].mxu0 %v957
      %v1070 = vpop.f32.mrb[0].mxu0
      %v1071 = vadd.f32 %v911, %v1070
      %v1072 = vpop.f32.mrb[0].mxu0
      %v1073 = vadd.f32 %v911, %v1072
      %v1074 = vpop.f32.mrb[0].mxu0
      %v1075 = vadd.f32 %v916, %v1074
      %v1076 = vpop.f32.mrb[0].mxu0
      %v1077 = vadd.f32 %v916, %v1076
      %1078 = vdwg.mxu0
      %1079 = vmatprep.subr.bf16.mxu0 %v793
      %1080 = vmatpush1.bf16.msra.mxu0 %v792
      %1081 = vmatprep.subr.bf16.mxu0 %v797
      %1082 = vmatpush1.bf16.msra.mxu0 %v796
      %1083 = vmatprep.subr.bf16.mxu0 %v801
      %1084 = vmatpush1.bf16.msra.mxu0 %v800
      %1085 = vmatprep.subr.bf16.mxu0 %v805
      %1086 = vmatpush1.bf16.msra.mxu0 %v804
      %1087 = vmatprep.subr.bf16.mxu0 %v809
      %1088 = vmatpush1.bf16.msra.mxu0 %v808
      %1089 = vmatprep.subr.bf16.mxu0 %v813
      %1090 = vmatpush1.bf16.msra.mxu0 %v812
      %1091 = vmatprep.subr.bf16.mxu0 %v817
      %1092 = vmatpush1.bf16.msra.mxu0 %v816
      %1093 = vmatprep.subr.bf16.mxu0 %v821
      %1094 = vmatpush1.bf16.msra.mxu0 %v820
      %1095 = vmatprep.subr.bf16.mxu0 0
      %1096 = vmatpush1.bf16.msra.mxu0 0
      %1097 = vmatprep.subr.bf16.mxu0 0
      %1098 = vmatpush1.bf16.msra.mxu0 0
      %1099 = vmatprep.subr.bf16.mxu0 0
      %1100 = vmatpush1.bf16.msra.mxu0 0
      %1101 = vmatprep.subr.bf16.mxu0 0
      %1102 = vmatpush1.bf16.msra.mxu0 0
      %1103 = vmatprep.subr.bf16.mxu0 0
      %1104 = vmatpush1.bf16.msra.mxu0 0
      %1105 = vmatprep.subr.bf16.mxu0 0
      %1106 = vmatpush1.bf16.msra.mxu0 0
      %1107 = vmatprep.subr.bf16.mxu0 0
      %1108 = vmatpush1.bf16.msra.mxu0 0
      %1109 = vmatprep.subr.bf16.mxu0 0
      %1110 = vmatpush1.bf16.msra.mxu0 0
      %1111 = vmatprep.mubr.bf16.mxu0 0
      %1112 = vmatmul.mubr.bf16.gmra.mrb[0].mxu0 %v950
      %v1113 = vpop.f32.mrb[0].mxu0
      %v1114 = vadd.f32 %v841, %v1113
      %v1115 = vpop.f32.mrb[0].mxu0
      %v1116 = vadd.f32 %v841, %v1115
      %v1117 = vpop.f32.mrb[0].mxu0
      %v1118 = vadd.f32 %v846, %v1117
      %v1119 = vpop.f32.mrb[0].mxu0
      %v1120 = vadd.f32 %v846, %v1119
      %1121 = vmatprep.mubr.bf16.mxu0 0
      %1122 = vmatmul.mubr.bf16.gmra.mrb[0].mxu0 %v951
      %v1123 = vpop.f32.mrb[0].mxu0
      %v1124 = vadd.f32 %v851, %v1123
      %v1125 = vpop.f32.mrb[0].mxu0
      %v1126 = vadd.f32 %v851, %v1125
      %v1127 = vpop.f32.mrb[0].mxu0
      %v1128 = vadd.f32 %v856, %v1127
      %v1129 = vpop.f32.mrb[0].mxu0
      %v1130 = vadd.f32 %v856, %v1129
      %1131 = vmatprep.mubr.bf16.mxu0 0
      %1132 = vmatmul.mubr.bf16.gmra.mrb[0].mxu0 %v952
      %v1133 = vpop.f32.mrb[0].mxu0
      %v1134 = vadd.f32 %v861, %v1133
      %v1135 = vpop.f32.mrb[0].mxu0
      %v1136 = vadd.f32 %v861, %v1135
      %v1137 = vpop.f32.mrb[0].mxu0
      %v1138 = vadd.f32 %v866, %v1137
      %v1139 = vpop.f32.mrb[0].mxu0
      %v1140 = vadd.f32 %v866, %v1139
      %1141 = vmatprep.mubr.bf16.mxu0 0
      %1142 = vmatmul.mubr.bf16.gmra.mrb[0].mxu0 %v953
      %v1143 = vpop.f32.mrb[0].mxu0
      %v1144 = vadd.f32 %v871, %v1143
      %v1145 = vpop.f32.mrb[0].mxu0
      %v1146 = vadd.f32 %v871, %v1145
      %v1147 = vpop.f32.mrb[0].mxu0
      %v1148 = vadd.f32 %v876, %v1147
      %v1149 = vpop.f32.mrb[0].mxu0
      %v1150 = vadd.f32 %v876, %v1149
      %1151 = vmatprep.mubr.bf16.mxu0 0
      %1152 = vmatmul.mubr.bf16.gmra.mrb[0].mxu0 %v954
      %v1153 = vpop.f32.mrb[0].mxu0
      %v1154 = vadd.f32 %v881, %v1153
      %v1155 = vpop.f32.mrb[0].mxu0
      %v1156 = vadd.f32 %v881, %v1155
      %v1157 = vpop.f32.mrb[0].mxu0
      %v1158 = vadd.f32 %v886, %v1157
      %v1159 = vpop.f32.mrb[0].mxu0
      %v1160 = vadd.f32 %v886, %v1159
      %1161 = vmatprep.mubr.bf16.mxu0 0
      %1162 = vmatmul.mubr.bf16.gmra.mrb[0].mxu0 %v955
      %v1163 = vpop.f32.mrb[0].mxu0
      %v1164 = vadd.f32 %v891, %v1163
      %v1165 = vpop.f32.mrb[0].mxu0
      %v1166 = vadd.f32 %v891, %v1165
      %v1167 = vpop.f32.mrb[0].mxu0
      %v1168 = vadd.f32 %v896, %v1167
      %v1169 = vpop.f32.mrb[0].mxu0
      %v1170 = vadd.f32 %v896, %v1169
      %1171 = vmatprep.mubr.bf16.mxu0 0
      %1172 = vmatmul.mubr.bf16.gmra.mrb[0].mxu0 %v956
      %v1173 = vpop.f32.mrb[0].mxu0
      %v1174 = vadd.f32 %v901, %v1173
      %v1175 = vpop.f32.mrb[0].mxu0
      %v1176 = vadd.f32 %v901, %v1175
      %v1177 = vpop.f32.mrb[0].mxu0
      %v1178 = vadd.f32 %v906, %v1177
      %v1179 = vpop.f32.mrb[0].mxu0
      %v1180 = vadd.f32 %v906, %v1179
      %1181 = vmatprep.mubr.bf16.mxu0 0
      %1182 = vmatmul.mubr.bf16.gmra.mrb[0].mxu0 %v957
      %v1183 = vpop.f32.mrb[0].mxu0
      %v1184 = vadd.f32 %v911, %v1183
      %v1185 = vpop.f32.mrb[0].mxu0
      %v1186 = vadd.f32 %v911, %v1185
      %v1187 = vpop.f32.mrb[0].mxu0
      %v1188 = vadd.f32 %v916, %v1187
      %v1189 = vpop.f32.mrb[0].mxu0
      %v1190 = vadd.f32 %v916, %v1189
      %1191 = vdwg.mxu0
      %v1192 = vmax.f32 %v1001, 0.0
      %v1193 = vmax.f32 %v1003, 0.0
      %v1194 = vmax.f32 %v1114, 0.0
      %v1195 = vmax.f32 %v1116, 0.0
      %v1196 = vmax.f32 %v1005, 0.0
      %v1197 = vmax.f32 %v1007, 0.0
      %v1198 = vmax.f32 %v1118, 0.0
      %v1199 = vmax.f32 %v1120, 0.0
      %v1200 = vmax.f32 %v1011, 0.0
      %v1201 = vmax.f32 %v1013, 0.0
      %v1202 = vmax.f32 %v1124, 0.0
      %v1203 = vmax.f32 %v1126, 0.0
      %v1204 = vmax.f32 %v1015, 0.0
      %v1205 = vmax.f32 %v1017, 0.0
      %v1206 = vmax.f32 %v1128, 0.0
      %v1207 = vmax.f32 %v1130, 0.0
      %v1208 = vmax.f32 %v1021, 0.0
      %v1209 = vmax.f32 %v1023, 0.0
      %v1210 = vmax.f32 %v1134, 0.0
      %v1211 = vmax.f32 %v1136, 0.0
      %v1212 = vmax.f32 %v1025, 0.0
      %v1213 = vmax.f32 %v1027, 0.0
      %v1214 = vmax.f32 %v1138, 0.0
      %v1215 = vmax.f32 %v1140, 0.0
      %v1216 = vmax.f32 %v1031, 0.0
      %v1217 = vmax.f32 %v1033, 0.0
      %v1218 = vmax.f32 %v1144, 0.0
      %v1219 = vmax.f32 %v1146, 0.0
      %v1220 = vmax.f32 %v1035, 0.0
      %v1221 = vmax.f32 %v1037, 0.0
      %v1222 = vmax.f32 %v1148, 0.0
      %v1223 = vmax.f32 %v1150, 0.0
      %v1224 = vmax.f32 %v1041, 0.0
      %v1225 = vmax.f32 %v1043, 0.0
      %v1226 = vmax.f32 %v1154, 0.0
      %v1227 = vmax.f32 %v1156, 0.0
      %v1228 = vmax.f32 %v1045, 0.0
      %v1229 = vmax.f32 %v1047, 0.0
      %v1230 = vmax.f32 %v1158, 0.0
      %v1231 = vmax.f32 %v1160, 0.0
      %v1232 = vmax.f32 %v1051, 0.0
      %v1233 = vmax.f32 %v1053, 0.0
      %v1234 = vmax.f32 %v1164, 0.0
      %v1235 = vmax.f32 %v1166, 0.0
      %v1236 = vmax.f32 %v1055, 0.0
      %v1237 = vmax.f32 %v1057, 0.0
      %v1238 = vmax.f32 %v1168, 0.0
      %v1239 = vmax.f32 %v1170, 0.0
      %v1240 = vmax.f32 %v1061, 0.0
      %v1241 = vmax.f32 %v1063, 0.0
      %v1242 = vmax.f32 %v1174, 0.0
      %v1243 = vmax.f32 %v1176, 0.0
      %v1244 = vmax.f32 %v1065, 0.0
      %v1245 = vmax.f32 %v1067, 0.0
      %v1246 = vmax.f32 %v1178, 0.0
      %v1247 = vmax.f32 %v1180, 0.0
      %v1248 = vmax.f32 %v1071, 0.0
      %v1249 = vmax.f32 %v1073, 0.0
      %v1250 = vmax.f32 %v1184, 0.0
      %v1251 = vmax.f32 %v1186, 0.0
      %v1252 = vmax.f32 %v1075, 0.0
      %v1253 = vmax.f32 %v1077, 0.0
      %v1254 = vmax.f32 %v1188, 0.0
      %v1255 = vmax.f32 %v1190, 0.0
      %v1256 = vld [vmem:[%s5] sm:$0x1]
      %v1257 = vpack.c.bf16 %v1196, %v1192
      %v1258 = vpack.c.bf16 %v1197, %v1193
      %v1259 = vpack.c.bf16 %v1198, %v1194
      %v1260 = vpack.c.bf16 %v1199, %v1195
      %v1261 = vpack.c.bf16 %v1204, %v1200
      %v1262 = vpack.c.bf16 %v1205, %v1201
      %v1263 = vpack.c.bf16 %v1206, %v1202
      %v1264 = vpack.c.bf16 %v1207, %v1203
      %v1265 = vpack.c.bf16 %v1212, %v1208
      %v1266 = vpack.c.bf16 %v1213, %v1209
      %v1267 = vpack.c.bf16 %v1214, %v1210
      %v1268 = vpack.c.bf16 %v1215, %v1211
      %v1269 = vpack.c.bf16 %v1220, %v1216
      %v1270 = vpack.c.bf16 %v1221, %v1217
      %v1271 = vpack.c.bf16 %v1222, %v1218
      %v1272 = vpack.c.bf16 %v1223, %v1219
      %v1273 = vpack.c.bf16 %v1228, %v1224
      %v1274 = vpack.c.bf16 %v1229, %v1225
      %v1275 = vpack.c.bf16 %v1230, %v1226
      %v1276 = vpack.c.bf16 %v1231, %v1227
      %v1277 = vpack.c.bf16 %v1236, %v1232
      %v1278 = vpack.c.bf16 %v1237, %v1233
      %v1279 = vpack.c.bf16 %v1238, %v1234
      %v1280 = vpack.c.bf16 %v1239, %v1235
      %v1281 = vpack.c.bf16 %v1244, %v1240
      %v1282 = vpack.c.bf16 %v1245, %v1241
      %v1283 = vpack.c.bf16 %v1246, %v1242
      %v1284 = vpack.c.bf16 %v1247, %v1243
      %v1285 = vpack.c.bf16 %v1252, %v1248
      %v1286 = vpack.c.bf16 %v1253, %v1249
      %v1287 = vpack.c.bf16 %v1254, %v1250
      %v1288 = vpack.c.bf16 %v1255, %v1251
      %v1289 = vld [vmem:[#allocation2] sm:$0x1]
      %1291 = vset.pattern.permute.xlu0 0
      %1292 = vperm.xlu0 %1291, %v1289
      %v1293 = vpop.permute.xlu0 %1292
      %v1295 = vlaneseq
      %v1296 = vshrl.u32 %v1295, 7
      %v1297 = vsub.s32 0, %v1296
      %v1298 = vrot.slane %v1293, %v1297
      %1299 = vmatprep.subr.bf16.mxu0 %v1258
      %1300 = vmatpush1.bf16.msra.mxu0 %v1257
      %1301 = vmatprep.subr.bf16.mxu0 %v1262
      %1302 = vmatpush1.bf16.msra.mxu0 %v1261
      %1303 = vmatprep.subr.bf16.mxu0 %v1266
      %1304 = vmatpush1.bf16.msra.mxu0 %v1265
      %1305 = vmatprep.subr.bf16.mxu0 %v1270
      %1306 = vmatpush1.bf16.msra.mxu0 %v1269
      %1307 = vmatprep.subr.bf16.mxu0 %v1274
      %1308 = vmatpush1.bf16.msra.mxu0 %v1273
      %1309 = vmatprep.subr.bf16.mxu0 %v1278
      %1310 = vmatpush1.bf16.msra.mxu0 %v1277
      %1311 = vmatprep.subr.bf16.mxu0 %v1282
      %1312 = vmatpush1.bf16.msra.mxu0 %v1281
      %1313 = vmatprep.subr.bf16.mxu0 %v1286
      %1314 = vmatpush1.bf16.msra.mxu0 %v1285
      %1315 = vmatprep.subr.bf16.mxu0 0
      %1316 = vmatpush1.bf16.msra.mxu0 0
      %1317 = vmatprep.subr.bf16.mxu0 0
      %1318 = vmatpush1.bf16.msra.mxu0 0
      %1319 = vmatprep.subr.bf16.mxu0 0
      %1320 = vmatpush1.bf16.msra.mxu0 0
      %1321 = vmatprep.subr.bf16.mxu0 0
      %1322 = vmatpush1.bf16.msra.mxu0 0
      %1323 = vmatprep.subr.bf16.mxu0 0
      %1324 = vmatpush1.bf16.msra.mxu0 0
      %1325 = vmatprep.subr.bf16.mxu0 0
      %1326 = vmatpush1.bf16.msra.mxu0 0
      %1327 = vmatprep.subr.bf16.mxu0 0
      %1328 = vmatpush1.bf16.msra.mxu0 0
      %1329 = vmatprep.subr.bf16.mxu0 0
      %1330 = vmatpush1.bf16.msra.mxu0 0
      %1331 = vmatprep.mubr.bf16.mxu0 0
      %1332 = vmatmul.mubr.bf16.gmra.mrb[0].mxu0 %v1256
      %v1333 = vpop.f32.mrb[0].mxu0
      %v1334 = vadd.f32 %v1298, %v1333
      %v1335 = vpop.f32.mrb[0].mxu0
      %v1336 = vadd.f32 %v1298, %v1335
      %v1337 = vpop.f32.mrb[0].mxu0
      %v1338 = vpop.f32.mrb[0].mxu0
      %1339 = vdwg.mxu0
      %1340 = vmatprep.subr.bf16.mxu0 %v1260
      %1341 = vmatpush1.bf16.msra.mxu0 %v1259
      %1342 = vmatprep.subr.bf16.mxu0 %v1264
      %1343 = vmatpush1.bf16.msra.mxu0 %v1263
      %1344 = vmatprep.subr.bf16.mxu0 %v1268
      %1345 = vmatpush1.bf16.msra.mxu0 %v1267
      %1346 = vmatprep.subr.bf16.mxu0 %v1272
      %1347 = vmatpush1.bf16.msra.mxu0 %v1271
      %1348 = vmatprep.subr.bf16.mxu0 %v1276
      %1349 = vmatpush1.bf16.msra.mxu0 %v1275
      %1350 = vmatprep.subr.bf16.mxu0 %v1280
      %1351 = vmatpush1.bf16.msra.mxu0 %v1279
      %1352 = vmatprep.subr.bf16.mxu0 %v1284
      %1353 = vmatpush1.bf16.msra.mxu0 %v1283
      %1354 = vmatprep.subr.bf16.mxu0 %v1288
      %1355 = vmatpush1.bf16.msra.mxu0 %v1287
      %1356 = vmatprep.subr.bf16.mxu0 0
      %1357 = vmatpush1.bf16.msra.mxu0 0
      %1358 = vmatprep.subr.bf16.mxu0 0
      %1359 = vmatpush1.bf16.msra.mxu0 0
      %1360 = vmatprep.subr.bf16.mxu0 0
      %1361 = vmatpush1.bf16.msra.mxu0 0
      %1362 = vmatprep.subr.bf16.mxu0 0
      %1363 = vmatpush1.bf16.msra.mxu0 0
      %1364 = vmatprep.subr.bf16.mxu0 0
      %1365 = vmatpush1.bf16.msra.mxu0 0
      %1366 = vmatprep.subr.bf16.mxu0 0
      %1367 = vmatpush1.bf16.msra.mxu0 0
      %1368 = vmatprep.subr.bf16.mxu0 0
      %1369 = vmatpush1.bf16.msra.mxu0 0
      %1370 = vmatprep.subr.bf16.mxu0 0
      %1371 = vmatpush1.bf16.msra.mxu0 0
      %1372 = vmatprep.mubr.bf16.mxu0 0
      %1373 = vmatmul.mubr.bf16.gmra.mrb[0].mxu0 %v1256
      %v1374 = vpop.f32.mrb[0].mxu0
      %v1375 = vadd.f32 %v1298, %v1374
      %v1376 = vpop.f32.mrb[0].mxu0
      %v1377 = vadd.f32 %v1298, %v1376
      %v1378 = vpop.f32.mrb[0].mxu0
      %v1379 = vpop.f32.mrb[0].mxu0
      %1380 = vdwg.mxu0
      %v1381 = vsub.f32 0.0, %v1334
      %v1382 = vsub.f32 0.0, %v1336
      %v1383 = vsub.f32 0.0, %v1375
      %v1384 = vsub.f32 0.0, %v1377
      %v1385 = vmul.f32 %v1381, 1.442695
      %v1386 = vpow.pop %v1385
      %v1387 = vmul.f32 %v1382, 1.442695
      %v1388 = vpow.pop %v1387
      %v1389 = vmul.f32 %v1383, 1.442695
      %v1390 = vpow.pop %v1389
      %v1391 = vmul.f32 %v1384, 1.442695
      %v1392 = vpow.pop %v1391
      %v1393 = vadd.f32 %v1386, 1.0
      %v1394 = vadd.f32 %v1388, 1.0
      %v1395 = vadd.f32 %v1390, 1.0
      %v1396 = vadd.f32 %v1392, 1.0
      %v1397 = vrcp.pop %v1393
      %v1398 = vrcp.pop %v1394
      %v1399 = vrcp.pop %v1395
      %v1400 = vrcp.pop %v1396
      %v1405 = vcombine.low %v1397, %v1398
      %v1406 = vcombine.low %v1399, %v1400
      %v1408 = vunpack.c.l.s4 1966171168
      %v1409 = vunpack.c.0.s8 %v1408
      %v1410 = vlaneseq
      %v1411 = vshrl.u32 %v1410, 7
      %v1412 = vsub.s32 %v1409, %v1411
      %v1413 = vrot.slane %v1405, %v1412
      %v1415 = vunpack.c.l.s4 1966171168
      %v1416 = vunpack.c.0.s8 %v1415
      %v1417 = vlaneseq
      %v1418 = vshrl.u32 %v1417, 7
      %v1419 = vsub.s32 %v1416, %v1418
      %v1420 = vrot.slane %v1406, %v1419
      %v1421 = vcombine.low %v1413, %v1420
      %v1423 = vunpack.c.l.s4 1966171168
      %v1424 = vunpack.c.0.s8 %v1423
      %v1425 = vlaneseq
      %v1426 = vshrl.u32 %v1425, 7
      %v1427 = vsub.s32 %v1424, %v1426
      %v1428 = vrot.slane %v1421, %v1427
      %v1430 = vlaneseq
      %vm1431 = vcmp.ge.s32.totalorder %v1430, 0
      %vm1432 = vcmp.lt.s32.totalorder %v1430, 512
      %vm1433 = vmand %vm1431, %vm1432
      %1434 = vst.msk [vmem:[%s280] sm:$0xf] %vm1433, %v1428
      %s1435 = smul.u32 4, %s20
      %p1436 = scmp.lt.s32.totalorder %s1435, 7
      %s1437 = scalar_select %p1436, %s1435, 7
      %s1438 = scalar_lea.vmem %s7, %s1437
      // Predicated region
      $region49: #{mlp_forward.1} parent=47 // pred_check
        %p1439 = pneg %p190
      $region50: #{mlp_forward.1} parent=47 // pred_check_branch
        %1441 = sbr.rel (%p1439) target = $region52
      $region51: #{mlp_forward.1} parent=47 // pred_region
        %s1442 = smul.u32 4, %s20
      $region52: #{mlp_forward.1} parent=47 // pred_fallthru
        _
    $region48: #{mlp_forward.1} parent=5 // pred_fallthru
      _
    %p1443 = scmp.le.s32.totalorder 2, %s15
    // Predicated region
    $region53: #{mlp_forward.1} parent=5 // pred_check
      %p1444 = pneg %p1443
    $region54: #{mlp_forward.1} parent=5 // pred_check_branch
      %1446 = sbr.rel (%p1444) target = $region56
    $region55: #{mlp_forward.1} parent=5 // pred_region
      %s1447 = ssub.s32 %s15, 2
      // Predicated region
      $region57: #{mlp_forward.1} parent=55 // pred_check
        %p1448 = pneg %p196
      $region58: #{mlp_forward.1} parent=55 // pred_check_branch
        %1450 = sbr.rel (%p1448) target = $region60
      $region59: #{mlp_forward.1} parent=55 // pred_region
        %s1451 = smul.u32 4, %s21
        %p1452 = scmp.lt.s32.totalorder %s1451, 7
        %s1453 = scalar_select %p1452, %s1451, 7
        %s1454 = scalar_lea.vmem %s7, %s1453
      $region60: #{mlp_forward.1} parent=55 // pred_fallthru
        _
    $region56: #{mlp_forward.1} parent=5 // pred_fallthru
      _
  $region6: #{mlp_forward.1} parent=0 // loop_footer
    %s19 = sadd.s32 1, %s15
  $region7: #{mlp_forward.1} parent=0 // loop_footer_branch
    %14 = sbr.rel target = $region3
  $region8: #{mlp_forward.1} parent=0 // loop_exit
    _

</llo_original>
